<compile_context>
chip_gen: v7x
topology: tpu7x:2x2x1
jax: 0.10.0
libtpu: 0.0.40
codegen_flags: <defaults>
</compile_context>

<pallas_src>
import functools

import jax
import jax.numpy as jnp
from jax.experimental import pallas as pl
from jax.experimental.pallas import tpu as pltpu


_HALO = 128  # right halo width (covers K-1 taps for any K <= 129)


def _round_up(x, m):
    return ((x + m - 1) // m) * m


def _pick_channel_tile(C):
    if C % 8 != 0:
        return C
    for cand in (256, 128, 64, 32, 16, 8):
        if cand <= C and C % cand == 0:
            return cand
    return C


def _lightconv_kernel(xc_ref, xh_ref, w_ref, b_ref, o_ref, *, K: int):
    # xc_ref: (1, Ct, Tt)    time tile of the pre-padded input
    # xh_ref: (1, Ct, HALO)  right halo (next HALO input columns)
    # w_ref : (1, Ct, K)     per-channel taps, f32
    # b_ref : (1, Ct, 1)     per-channel bias, f32
    # o_ref : (1, Ct, Tt)
    Ct = o_ref.shape[1]
    Tt = o_ref.shape[2]

    # Contiguous (Ct, Tt + HALO) window; both pieces are 128-lane aligned.
    ext = jnp.concatenate([xc_ref[0], xh_ref[0]], axis=-1)
    w = w_ref[0]                                        # (Ct, K) f32

    # Accumulator initialized with the bias (drops the trailing "+ bias" pass).
    acc = jnp.broadcast_to(b_ref[0], (Ct, Tt))          # f32

    # K is small and static: unrolled shift-and-scale cross-correlation on the VPU.
    # (Shifts are static lane offsets; accumulate in f32.)
    for k in range(K):
        acc = acc + w[:, k:k + 1] * ext[:, k:k + Tt].astype(jnp.float32)

    o_ref[0] = acc.astype(o_ref.dtype)


def lightweight_conv1d(x, weight, bias=None, *, padding=0, heads=1,
                       weight_softmax=False):
    """x: (B, C, T).  weight: (heads, 1, K).  bias: (C,) or None."""
    B, C, T = x.shape
    H, _, K = weight.shape
    assert (B * C) % H == 0, "B*C must be divisible by heads (matches view(-1,H,T))"
    assert K - 1 <= _HALO, "kernel_size > 129 not supported by this tiling"

    T_out = T + 2 * padding - K + 1
    assert T_out > 0, "kernel larger than padded input"

    # --- weights (kept in f32 end-to-end; softmax never quantized) -------------
    wsm = weight[:, 0, :].astype(jnp.float32)            # (H, K)
    if weight_softmax:
        wsm = jax.nn.softmax(wsm, axis=-1)

    if C % H == 0:
        # head of channel c is batch-independent: h = c % H
        w_arr = wsm[jnp.arange(C) % H].reshape(1, C, K)   # (1, C, K)
        w_index = lambda b, ci, ti: (0, ci, 0)
    else:
        head_idx = (jnp.arange(B * C) % H).reshape(B, C)
        w_arr = wsm[head_idx]                             # (B, C, K)
        w_index = lambda b, ci, ti: (b, ci, 0)

    bias_arr = (jnp.zeros((C,), jnp.float32) if bias is None
                else bias.astype(jnp.float32))
    bias_3d = bias_arr.reshape(1, C, 1)

    # --- tiling -----------------------------------------------------------------
    Ct = _pick_channel_tile(C)
    nC = C // Ct

    if T_out <= 1024:
        Tt = _round_up(T_out, 128)
    elif T_out < 4096:
        Tt = 512
    else:
        Tt = 1024
    T_out_pad = _round_up(T_out, Tt)
    nT = T_out_pad // Tt
    tpb = Tt // 128                                       # halo blocks per time tile

    # Single combined pad: conv zero-padding + right alignment/halo.
    T_in_pad = T_out_pad + _HALO
    left = padding
    right = T_in_pad - T - padding
    x_pad = jnp.pad(x, ((0, 0), (0, 0), (left, right)))

    in_itemsize = jnp.dtype(x.dtype).itemsize
    per_step = (Ct * (Tt + _HALO) * in_itemsize          # input tile + halo
                + Ct * Tt * in_itemsize                   # output tile
                + Ct * (K + 1) * 4)                       # weights + bias
    vmem_limit = int(min(32 * 1024 * 1024,
                         max(8 * 1024 * 1024, 4 * per_step + (2 << 20))))

    cost = pl.CostEstimate(
        flops=int(2 * B * C * T_out_pad * K),
        transcendentals=0,
        bytes_accessed=int(B * C * (T_in_pad + T_out_pad) * in_itemsize
                           + int(w_arr.size) * 4 + C * 4),
    )

    kernel = functools.partial(_lightconv_kernel, K=K)

    out_padded = pl.pallas_call(
        kernel,
        out_shape=jax.ShapeDtypeStruct((B, C, T_out_pad), x.dtype),
        grid_spec=pltpu.PrefetchScalarGridSpec(
            num_scalar_prefetch=0,
            grid=(B, nC, nT),
            in_specs=[
                # center time tile of the input
                pl.BlockSpec((1, Ct, Tt),
                             lambda b, ci, ti: (b, ci, ti)),
                # 128-wide right halo (next columns of the same array)
                pl.BlockSpec((1, Ct, _HALO),
                             lambda b, ci, ti, _tpb=tpb: (b, ci, (ti + 1) * _tpb)),
                # per-channel taps (f32, VMEM-resident across time tiles)
                pl.BlockSpec((1, Ct, K), w_index),
                # per-channel bias (shared across batch)
                pl.BlockSpec((1, Ct, 1), lambda b, ci, ti: (0, ci, 0)),
            ],
            out_specs=pl.BlockSpec((1, Ct, Tt), lambda b, ci, ti: (b, ci, ti)),
        ),
        compiler_params=pltpu.CompilerParams(
            dimension_semantics=("parallel", "parallel", "parallel"),
            vmem_limit_bytes=vmem_limit),
        cost_estimate=cost,
    )(x_pad, x_pad, w_arr, bias_3d)

    return out_padded[:, :, :T_out]


def _reference(x, weight, bias, padding, heads, weight_softmax):
    # Pure-JAX reference mirroring the PyTorch forward exactly.
    B, C, T = x.shape
    H, _, K = weight.shape
    w = weight[:, 0, :]
    if weight_softmax:
        w = jax.nn.softmax(w, axis=-1)
    xi = x.reshape(-1, H, T)
    xi = jnp.pad(xi, ((0, 0), (0, 0), (padding, padding)))
    T_out = T + 2 * padding - K + 1
    out = jnp.zeros((xi.shape[0], H, T_out), jnp.float32)
    for k in range(K):
        out = out + w[None, :, k:k + 1] * xi[:, :, k:k + T_out]
    out = out.reshape(B, C, T_out)
    if bias is not None:
        out = out + bias.reshape(1, -1, 1)
    return out.astype(x.dtype)


if __name__ == "__main__":
    B, C, T = 2, 8, 16
    heads, K, padding = 4, 3, 1
    weight_softmax = True
    use_bias = True

    key = jax.random.PRNGKey(0)
    kx, kw = jax.random.split(key)

    x = jax.random.normal(kx, (B, C, T), jnp.float32)

    # Deterministic xavier_uniform-style init for weight (heads, 1, K).
    fan_in, fan_out = 1 * K, heads * K
    limit = (6.0 / (fan_in + fan_out)) ** 0.5
    weight = jax.random.uniform(kw, (heads, 1, K), jnp.float32, -limit, limit)
    bias = jnp.zeros((C,), jnp.float32) if use_bias else None

    out = lightweight_conv1d(x, weight, bias, padding=padding, heads=heads,
                             weight_softmax=weight_softmax)
    out = jax.block_until_ready(out)

    ref = _reference(x, weight, bias, padding, heads, weight_softmax)
    assert out.shape == ref.shape == (B, C, T + 2 * padding - K + 1)
    assert jnp.allclose(out, ref, atol=1e-5, rtol=1e-5)

    print("KERNEL_OK")
</pallas_src>

<mosaic_0001>
module attributes {stable_mosaic.version = 11 : i64} {
  func.func @_lightconv_kernel(%arg0: i32, %arg1: i32, %arg2: i32, %arg3: memref<1x8x128xf32, #tpu.memory_space<vmem>>, %arg4: memref<1x8x128xf32, #tpu.memory_space<vmem>>, %arg5: memref<1x8x3xf32, #tpu.memory_space<vmem>>, %arg6: memref<1x8x1xf32, #tpu.memory_space<vmem>>, %arg7: memref<1x8x128xf32, #tpu.memory_space<vmem>>) attributes {dimension_semantics = [#tpu.dimension_semantics<parallel>, #tpu.dimension_semantics<parallel>, #tpu.dimension_semantics<parallel>], iteration_bounds = array<i64: 2, 1, 1>, scalar_prefetch = 0 : i64, scratch_operands = 0 : i64, tpu.core_type = #tpu.core_type<tc>, window_params = [{transform_indices = @transform_0, window_bounds = array<i64: 1, 8, 128>}, {transform_indices = @transform_1, window_bounds = array<i64: 1, 8, 128>}, {transform_indices = @transform_2, window_bounds = array<i64: 1, 8, 3>}, {transform_indices = @transform_3, window_bounds = array<i64: 1, 8, 1>}, {transform_indices = @transform_4, window_bounds = array<i64: 1, 8, 128>}]} {
    %c0 = arith.constant 0 : index
    %c0_0 = arith.constant 0 : index
    %c0_1 = arith.constant 0 : index
    %0 = vector.load %arg3[%c0, %c0_0, %c0_1] : memref<1x8x128xf32, #tpu.memory_space<vmem>>, vector<1x8x128xf32>
    %1 = vector.shape_cast %0 : vector<1x8x128xf32> to vector<8x128xf32>
    %c0_2 = arith.constant 0 : index
    %c0_3 = arith.constant 0 : index
    %c0_4 = arith.constant 0 : index
    %2 = vector.load %arg4[%c0_2, %c0_3, %c0_4] : memref<1x8x128xf32, #tpu.memory_space<vmem>>, vector<1x8x128xf32>
    %3 = vector.shape_cast %2 : vector<1x8x128xf32> to vector<8x128xf32>
    %4 = tpu.concatenate %1, %3 in 1 : vector<8x128xf32>, vector<8x128xf32> -> vector<8x256xf32>
    %c0_5 = arith.constant 0 : index
    %c0_6 = arith.constant 0 : index
    %c0_7 = arith.constant 0 : index
    %5 = vector.load %arg5[%c0_5, %c0_6, %c0_7] : memref<1x8x3xf32, #tpu.memory_space<vmem>>, vector<1x8x3xf32>
    %6 = vector.shape_cast %5 : vector<1x8x3xf32> to vector<8x3xf32>
    %c0_8 = arith.constant 0 : index
    %c0_9 = arith.constant 0 : index
    %c0_10 = arith.constant 0 : index
    %7 = vector.load %arg6[%c0_8, %c0_9, %c0_10] : memref<1x8x1xf32, #tpu.memory_space<vmem>>, vector<1x8x1xf32>
    %8 = vector.shape_cast %7 : vector<1x8x1xf32> to vector<8x1xf32>
    %9 = vector.shape_cast %8 : vector<8x1xf32> to vector<8x1xf32>
    %10 = vector.broadcast %9 : vector<8x1xf32> to vector<8x128xf32>
    %11 = vector.extract_strided_slice %6 {offsets = [0, 0], sizes = [8, 1], strides = [1, 1]} : vector<8x3xf32> to vector<8x1xf32>
    %12 = vector.extract_strided_slice %4 {offsets = [0, 0], sizes = [8, 128], strides = [1, 1]} : vector<8x256xf32> to vector<8x128xf32>
    %13 = vector.broadcast %11 : vector<8x1xf32> to vector<8x128xf32>
    %14 = arith.mulf %13, %12 : vector<8x128xf32>
    %15 = arith.addf %10, %14 : vector<8x128xf32>
    %16 = vector.extract_strided_slice %6 {offsets = [0, 1], sizes = [8, 1], strides = [1, 1]} : vector<8x3xf32> to vector<8x1xf32>
    %17 = vector.extract_strided_slice %4 {offsets = [0, 1], sizes = [8, 128], strides = [1, 1]} : vector<8x256xf32> to vector<8x128xf32>
    %18 = vector.broadcast %16 : vector<8x1xf32> to vector<8x128xf32>
    %19 = arith.mulf %18, %17 : vector<8x128xf32>
    %20 = arith.addf %15, %19 : vector<8x128xf32>
    %21 = vector.extract_strided_slice %6 {offsets = [0, 2], sizes = [8, 1], strides = [1, 1]} : vector<8x3xf32> to vector<8x1xf32>
    %22 = vector.extract_strided_slice %4 {offsets = [0, 2], sizes = [8, 128], strides = [1, 1]} : vector<8x256xf32> to vector<8x128xf32>
    %23 = vector.broadcast %21 : vector<8x1xf32> to vector<8x128xf32>
    %24 = arith.mulf %23, %22 : vector<8x128xf32>
    %25 = arith.addf %20, %24 : vector<8x128xf32>
    %c0_11 = arith.constant 0 : index
    %c0_12 = arith.constant 0 : index
    %c0_13 = arith.constant 0 : index
    %26 = vector.load %arg7[%c0_11, %c0_12, %c0_13] : memref<1x8x128xf32, #tpu.memory_space<vmem>>, vector<1x8x128xf32>
    %27 = vector.shape_cast %26 : vector<1x8x128xf32> to vector<8x128xf32>
    %28 = vector.shape_cast %25 : vector<8x128xf32> to vector<1x8x128xf32>
    tpu.vector_store %arg7[%c0_11, %c0_12, %c0_13], %28 {strides = array<i32>} : memref<1x8x128xf32, #tpu.memory_space<vmem>>, vector<1x8x128xf32>,
    return
  }
  func.func @transform_0(%arg0: i32, %arg1: i32, %arg2: i32) -> (i32, i32, i32) {
    %c0_i32 = arith.constant 0 : i32
    return %arg0, %arg1, %arg2 : i32, i32, i32
  }
  func.func @transform_1(%arg0: i32, %arg1: i32, %arg2: i32) -> (i32, i32, i32) {
    %c1_i32 = arith.constant 1 : i32
    %0 = arith.addi %arg2, %c1_i32 : i32
    %c1_i32_0 = arith.constant 1 : i32
    %1 = arith.muli %0, %c1_i32_0 : i32
    %c0_i32 = arith.constant 0 : i32
    return %arg0, %arg1, %1 : i32, i32, i32
  }
  func.func @transform_2(%arg0: i32, %arg1: i32, %arg2: i32) -> (i32, i32, i32) {
    %c0_i32 = arith.constant 0 : i32
    %c0_i32_0 = arith.constant 0 : i32
    %c0_i32_1 = arith.constant 0 : i32
    return %c0_i32, %arg1, %c0_i32_0 : i32, i32, i32
  }
  func.func @transform_3(%arg0: i32, %arg1: i32, %arg2: i32) -> (i32, i32, i32) {
    %c0_i32 = arith.constant 0 : i32
    %c0_i32_0 = arith.constant 0 : i32
    %c0_i32_1 = arith.constant 0 : i32
    return %c0_i32, %arg1, %c0_i32_0 : i32, i32, i32
  }
  func.func @transform_4(%arg0: i32, %arg1: i32, %arg2: i32) -> (i32, i32, i32) {
    %c0_i32 = arith.constant 0 : i32
    return %arg0, %arg1, %arg2 : i32, i32, i32
  }
}

</mosaic_0001>

<llo_original>
// kernel: tpu_custom_call.1
$region0: #{tpu_custom_call.1}
  #allocation0 [shape = 'u32[]', space=smem, size = 0x4, offset = 0x4, fixed_abs, tag = 'smem constant byte address 0x4 - core index']
  #allocation1 [shape = 'u32[144,128]{1,0:T(1,128)}', space=vmem, size = 0x12000, scoped, tag = 'internal scratch']
  %s0 = inlined_call_operand.hbm [shape: f32[2,8,256], index: 0, kind: input, shape index: {}]
  %s1 = inlined_call_operand.hbm [shape: f32[2,8,256], index: 1, kind: input, shape index: {}]
  %s2 = inlined_call_operand.vmem [shape: f32[1,8,3], index: 2, kind: input, shape index: {}]
  %s3 = inlined_call_operand.vmem [shape: f32[1,8,1], index: 3, kind: input, shape index: {}]
  %s4 = inlined_call_operand.hbm [shape: f32[2,8,128], index: 4, kind: output, shape index: {}]
  %s5 = sld [smem:[#allocation0]]
  $region57: #{tpu_custom_call.1} parent=0
    _
  %s7 = ssub.s32 1, %s5
  %s8 = scalar_select 0, %s7, %s5
  $region1: #{tpu_custom_call.1} parent=0
    #allocation2 [shape = 'u8[8192]{0}', space=vmem, size = 0x2000, scoped, tag = 'input window, operand 0']
    #allocation3 [shape = 's32[2]{0}', space=sflag, size = 0x8, scoped, tag = 'scoped memory for tpu_custom_call.1']
    #allocation4 [shape = 's32[2]{0}', space=sflag, size = 0x8, scoped, tag = 'scoped memory for tpu_custom_call.1']
    #allocation5 [shape = 'u8[8192]{0}', space=vmem, size = 0x2000, scoped, tag = 'input window, operand 1']
    #allocation6 [shape = 's32[2]{0}', space=sflag, size = 0x8, scoped, tag = 'scoped memory for tpu_custom_call.1']
    #allocation7 [shape = 'u8[8192]{0}', space=vmem, size = 0x2000, scoped, tag = 'output window, operand 0']
    %9 = vsyncpa [#allocation3], 0
    %s10 = scalar_lea.sflag [#allocation3], 1
    %11 = vsyncpa %s10, 0
    %12 = vsyncpa [#allocation6], 0
    %s13 = scalar_lea.sflag [#allocation6], 1
    %14 = vsyncpa %s13, 0
    %15 = vsyncpa [#allocation4], 0
    %s16 = scalar_lea.sflag [#allocation4], 1
    %17 = vsyncpa %s16, 0
    loop: start=0, step=1, limit=4
    $region2: #{tpu_custom_call.1} parent=1 // loop_pre_header
      _
    $region3: #{tpu_custom_call.1} parent=1 // loop_header
      %s19 = sphi 0, %s23
      %p20 = scmp.ge.s32.totalorder %s19, 4
      %s26 = sphi 0, %s45
      %s27 = sphi 0, %s41
      %s28 = sphi 0, %s37
      %s29 = sphi 0, %s26
      %s30 = sphi 0, %s27
      %s31 = sphi 0, %s28
      %s32 = sphi 0, %s29
      %s33 = sphi 0, %s30
      %s34 = sphi 0, %s31
      %s52 = sphi 0, %s54
      %s55 = sphi 0, %s52
      %s56 = sphi 0, %s55
      %s72 = sphi 0, %s56
      %s84 = sphi 0, %s86
      %s87 = sphi 0, %s84
      %s88 = sphi 0, %s87
      %s104 = sphi 0, %s88
      %s110 = sphi 0, %s112
      %s113 = sphi 0, %s110
      %s114 = sphi 0, %s113
      %s130 = sphi 0, %s114
      %s136 = sphi 0, %s138
      %s139 = sphi 0, %s136
      %s140 = sphi 0, %s139
      %s156 = sphi 0, %s140
      %s166 = sphi 0, %s168
      %s169 = sphi 0, %s166
      %s170 = sphi 0, %s169
      %s186 = sphi 0, %s170
    $region4: #{tpu_custom_call.1} parent=1 // loop_header_branch
      %22 = sbr.rel (%p20) target = $region8
    $region5: #{tpu_custom_call.1} parent=1 // loop_body
      %s24 = ssub.s32 %s19, 1
      %s25 = ssub.s32 %s19, 2
      %s35 = sadd.s32 1, %s28
      %p36 = scmp.ge.s32.totalorder %s35, 1
      %s37 = scalar_select %p36, 0, %s35
      %s38 = sadd.s32 1, %s27
      %s39 = scalar_select %p36, %s38, %s27
      %p40 = scmp.ge.s32.totalorder %s39, 1
      %s41 = scalar_select %p40, 0, %s39
      %s42 = sadd.s32 1, %s26
      %s43 = scalar_select %p40, %s42, %s26
      %p44 = scmp.ge.s32.totalorder %s43, 2
      %s45 = scalar_select %p44, 0, %s43
      %s46 = ssub.s32 %s26, %s45
      %s47 = ssub.s32 %s27, %s41
      %s48 = sor.u32 %s46, %s47
      %s49 = ssub.s32 %s28, %s37
      %s50 = sor.u32 %s48, %s49
      %p51 = scmp.eq.s32.totalorder %s50, 0
      %s53 = sadd.s32 %s52, 1
      %s54 = scalar_select %p51, %s52, %s53
      %p57 = pneg %p51
      %p58 = scmp.eq.s32.totalorder %s19, 1
      %p59 = por %p57, %p58
      %p60 = scmp.ne.s32.totalorder %s52, %s55
      %p61 = scmp.eq.s32.totalorder %s19, 0
      %p62 = por %p60, %p61
      %p63 = scmp.ne.s32.totalorder %s52, %s55
      %p64 = scmp.eq.s32.totalorder %s24, 1
      %p65 = por %p63, %p64
      %p66 = scmp.ne.s32.totalorder %s55, %s56
      %p67 = scmp.eq.s32.totalorder %s24, 0
      %p68 = por %p66, %p67
      %p69 = scmp.ne.s32.totalorder %s55, %s56
      %p70 = scmp.eq.s32.totalorder %s25, 1
      %p71 = por %p69, %p70
      %p73 = scmp.ne.s32.totalorder %s56, %s72
      %p74 = scmp.eq.s32.totalorder %s25, 0
      %p75 = por %p73, %p74
      %s76 = sadd.s32 %s28, 1
      %s77 = sadd.s32 %s37, 1
      %s78 = ssub.s32 %s26, %s45
      %s79 = ssub.s32 %s27, %s41
      %s80 = sor.u32 %s78, %s79
      %s81 = ssub.s32 %s76, %s77
      %s82 = sor.u32 %s80, %s81
      %p83 = scmp.eq.s32.totalorder %s82, 0
      %s85 = sadd.s32 %s84, 1
      %s86 = scalar_select %p83, %s84, %s85
      %p89 = pneg %p83
      %p90 = scmp.eq.s32.totalorder %s19, 1
      %p91 = por %p89, %p90
      %p92 = scmp.ne.s32.totalorder %s84, %s87
      %p93 = scmp.eq.s32.totalorder %s19, 0
      %p94 = por %p92, %p93
      %p95 = scmp.ne.s32.totalorder %s84, %s87
      %p96 = scmp.eq.s32.totalorder %s24, 1
      %p97 = por %p95, %p96
      %p98 = scmp.ne.s32.totalorder %s87, %s88
      %p99 = scmp.eq.s32.totalorder %s24, 0
      %p100 = por %p98, %p99
      %p101 = scmp.ne.s32.totalorder %s87, %s88
      %p102 = scmp.eq.s32.totalorder %s25, 1
      %p103 = por %p101, %p102
      %p105 = scmp.ne.s32.totalorder %s88, %s104
      %p106 = scmp.eq.s32.totalorder %s25, 0
      %p107 = por %p105, %p106
      %s108 = ssub.s32 %s27, %s41
      %p109 = scmp.eq.s32.totalorder %s108, 0
      %s111 = sadd.s32 %s110, 1
      %s112 = scalar_select %p109, %s110, %s111
      %p115 = pneg %p109
      %p116 = scmp.eq.s32.totalorder %s19, 1
      %p117 = por %p115, %p116
      %p118 = scmp.ne.s32.totalorder %s110, %s113
      %p119 = scmp.eq.s32.totalorder %s19, 0
      %p120 = por %p118, %p119
      %p121 = scmp.ne.s32.totalorder %s110, %s113
      %p122 = scmp.eq.s32.totalorder %s24, 1
      %p123 = por %p121, %p122
      %p124 = scmp.ne.s32.totalorder %s113, %s114
      %p125 = scmp.eq.s32.totalorder %s24, 0
      %p126 = por %p124, %p125
      %p127 = scmp.ne.s32.totalorder %s113, %s114
      %p128 = scmp.eq.s32.totalorder %s25, 1
      %p129 = por %p127, %p128
      %p131 = scmp.ne.s32.totalorder %s114, %s130
      %p132 = scmp.eq.s32.totalorder %s25, 0
      %p133 = por %p131, %p132
      %s134 = ssub.s32 %s27, %s41
      %p135 = scmp.eq.s32.totalorder %s134, 0
      %s137 = sadd.s32 %s136, 1
      %s138 = scalar_select %p135, %s136, %s137
      %p141 = pneg %p135
      %p142 = scmp.eq.s32.totalorder %s19, 1
      %p143 = por %p141, %p142
      %p144 = scmp.ne.s32.totalorder %s136, %s139
      %p145 = scmp.eq.s32.totalorder %s19, 0
      %p146 = por %p144, %p145
      %p147 = scmp.ne.s32.totalorder %s136, %s139
      %p148 = scmp.eq.s32.totalorder %s24, 1
      %p149 = por %p147, %p148
      %p150 = scmp.ne.s32.totalorder %s139, %s140
      %p151 = scmp.eq.s32.totalorder %s24, 0
      %p152 = por %p150, %p151
      %p153 = scmp.ne.s32.totalorder %s139, %s140
      %p154 = scmp.eq.s32.totalorder %s25, 1
      %p155 = por %p153, %p154
      %p157 = scmp.ne.s32.totalorder %s140, %s156
      %p158 = scmp.eq.s32.totalorder %s25, 0
      %p159 = por %p157, %p158
      %s160 = ssub.s32 %s26, %s45
      %s161 = ssub.s32 %s27, %s41
      %s162 = sor.u32 %s160, %s161
      %s163 = ssub.s32 %s28, %s37
      %s164 = sor.u32 %s162, %s163
      %p165 = scmp.eq.s32.totalorder %s164, 0
      %s167 = sadd.s32 %s166, 1
      %s168 = scalar_select %p165, %s166, %s167
      %p171 = pneg %p165
      %p172 = scmp.eq.s32.totalorder %s19, 1
      %p173 = por %p171, %p172
      %p174 = scmp.ne.s32.totalorder %s166, %s169
      %p175 = scmp.eq.s32.totalorder %s19, 0
      %p176 = por %p174, %p175
      %p177 = scmp.ne.s32.totalorder %s166, %s169
      %p178 = scmp.eq.s32.totalorder %s24, 1
      %p179 = por %p177, %p178
      %p180 = scmp.ne.s32.totalorder %s169, %s170
      %p181 = scmp.eq.s32.totalorder %s24, 0
      %p182 = por %p180, %p181
      %p183 = scmp.ne.s32.totalorder %s169, %s170
      %p184 = scmp.eq.s32.totalorder %s25, 1
      %p185 = por %p183, %p184
      %p187 = scmp.ne.s32.totalorder %s170, %s186
      %p188 = scmp.eq.s32.totalorder %s25, 0
      %p189 = por %p187, %p188
      %p190 = scmp.le.s32.totalorder 1, %s19
      %p191 = scmp.lt.s32.totalorder %s19, 3
      %p192 = pnand %p190, %p191
      %p193 = pneg %p192
      // Predicated region
      $region9: #{tpu_custom_call.1} parent=5 // pred_check
        _
      $region10: #{tpu_custom_call.1} parent=5 // pred_check_branch
        %195 = sbr.rel (%p192) target = $region12
      $region11: #{tpu_custom_call.1} parent=5 // pred_region
        %s196 = ssub.s32 %s19, 1
        // Predicated region
        $region13: #{tpu_custom_call.1} parent=11 // pred_check
          %p197 = pneg %p126
        $region14: #{tpu_custom_call.1} parent=11 // pred_check_branch
          %199 = sbr.rel (%p197) target = $region16
        $region15: #{tpu_custom_call.1} parent=11 // pred_region
          %p200 = scmp.lt.s32.totalorder %s30, 0
          %s201 = scalar_select %p200, %s30, 0
          %s202 = smul.addr %s201, 8
          %s203 = scalar_lea.vmem %s2, %s202
        $region16: #{tpu_custom_call.1} parent=11 // pred_fallthru
          _
        // Predicated region
        $region17: #{tpu_custom_call.1} parent=11 // pred_check
          %p204 = pneg %p152
        $region18: #{tpu_custom_call.1} parent=11 // pred_check_branch
          %206 = sbr.rel (%p204) target = $region20
        $region19: #{tpu_custom_call.1} parent=11 // pred_region
          %p207 = scmp.lt.s32.totalorder %s30, 0
          %s208 = scalar_select %p207, %s30, 0
          %s209 = smul.addr %s208, 8
          %s210 = scalar_lea.vmem %s3, %s209
        $region20: #{tpu_custom_call.1} parent=11 // pred_fallthru
          _
      $region12: #{tpu_custom_call.1} parent=5 // pred_fallthru
        _
      %p211 = scmp.lt.s32.totalorder %s19, 2
      // Predicated region
      $region21: #{tpu_custom_call.1} parent=5 // pred_check
        %p212 = pneg %p211
      $region22: #{tpu_custom_call.1} parent=5 // pred_check_branch
        %214 = sbr.rel (%p212) target = $region24
      $region23: #{tpu_custom_call.1} parent=5 // pred_region
        // Predicated region
        $region25: #{tpu_custom_call.1} parent=23 // pred_check
          %p215 = pneg %p62
        $region26: #{tpu_custom_call.1} parent=23 // pred_check_branch
          %217 = sbr.rel (%p215) target = $region28
        $region27: #{tpu_custom_call.1} parent=23 // pred_region
          %s218 = sand.u32 %s52, 1
          %s219 = scalar_lea.sflag [#allocation3], %s218
          %s220 = sand.u32 %s52, 1
          %s221 = smul.addr %s220, 8
          %s222 = scalar_lea.vmem [#allocation2], %s221
          %s224 = ssub.s32 128, 128
          %225 = vsyncadd %s219, %s224
          %s226 = smul.addr %s27, 2
          %s227 = sadd.s32 %s28, %s226
          %s228 = smul.addr %s26, 2
          %s229 = sadd.s32 %s227, %s228
          %s230 = smul.addr %s229, 128
          %s231 = scalar_lea.hbm %s0, %s230
          %s233 = sshll.u32 %s222, 4
          %s234 = int_to_ptr.vmem [resolvable:$true] %s233
          %236 = dma.hbm_to_vmem [thread:$0]  %s231, 128, %s234, %s219
        $region28: #{tpu_custom_call.1} parent=23 // pred_fallthru
          _
        // Predicated region
        $region29: #{tpu_custom_call.1} parent=23 // pred_check
          %p237 = pneg %p94
        $region30: #{tpu_custom_call.1} parent=23 // pred_check_branch
          %239 = sbr.rel (%p237) target = $region32
        $region31: #{tpu_custom_call.1} parent=23 // pred_region
          %s240 = sand.u32 %s84, 1
          %s241 = scalar_lea.sflag [#allocation6], %s240
          %s242 = sand.u32 %s84, 1
          %s243 = smul.addr %s242, 8
          %s244 = scalar_lea.vmem [#allocation5], %s243
          %s245 = sadd.s32 %s28, 1
          %s247 = ssub.s32 128, 128
          %248 = vsyncadd %s241, %s247
          %s249 = smul.addr %s27, 2
          %s250 = sadd.s32 %s245, %s249
          %s251 = smul.addr %s26, 2
          %s252 = sadd.s32 %s250, %s251
          %s253 = smul.addr %s252, 128
          %s254 = scalar_lea.hbm %s1, %s253
          %s256 = sshll.u32 %s244, 4
          %s257 = int_to_ptr.vmem [resolvable:$true] %s256
          %259 = dma.hbm_to_vmem [thread:$0]  %s254, 128, %s257, %s241
        $region32: #{tpu_custom_call.1} parent=23 // pred_fallthru
          _
      $region24: #{tpu_custom_call.1} parent=5 // pred_fallthru
        _
      %p260 = scmp.le.s32.totalorder 1, %s19
      %p261 = scmp.lt.s32.totalorder %s19, 3
      %p262 = pnand %p260, %p261
      %p263 = pneg %p262
      // Predicated region
      $region33: #{tpu_custom_call.1} parent=5 // pred_check
        _
      $region34: #{tpu_custom_call.1} parent=5 // pred_check_branch
        %265 = sbr.rel (%p262) target = $region36
      $region35: #{tpu_custom_call.1} parent=5 // pred_region
        %s266 = ssub.s32 %s19, 1
        %s267 = sand.u32 %s55, 1
        %s268 = scalar_lea.sflag [#allocation3], %s267
        %s269 = sand.u32 %s55, 1
        %s270 = smul.addr %s269, 8
        %s271 = scalar_lea.vmem [#allocation2], %s270
        // Predicated region
        $region37: #{tpu_custom_call.1} parent=35 // pred_check
          %p272 = pneg %p68
        $region38: #{tpu_custom_call.1} parent=35 // pred_check_branch
          %274 = sbr.rel (%p272) target = $region40
        $region39: #{tpu_custom_call.1} parent=35 // pred_region
          %275 = dma.done %s268, 128
        $region40: #{tpu_custom_call.1} parent=35 // pred_fallthru
          _
        %s276 = sand.u32 %s87, 1
        %s277 = scalar_lea.sflag [#allocation6], %s276
        %s278 = sand.u32 %s87, 1
        %s279 = smul.addr %s278, 8
        %s280 = scalar_lea.vmem [#allocation5], %s279
        // Predicated region
        $region41: #{tpu_custom_call.1} parent=35 // pred_check
          %p281 = pneg %p100
        $region42: #{tpu_custom_call.1} parent=35 // pred_check_branch
          %283 = sbr.rel (%p281) target = $region44
        $region43: #{tpu_custom_call.1} parent=35 // pred_region
          %284 = dma.done %s277, 128
        $region44: #{tpu_custom_call.1} parent=35 // pred_fallthru
          _
        %s285 = sand.u32 %s55, 1
        %s286 = scalar_lea.sflag [#allocation3], %s285
        %s287 = sand.u32 %s55, 1
        %s288 = smul.addr %s287, 8
        %s289 = scalar_lea.vmem [#allocation2], %s288
        %p290 = pneg %p68
        %p291 = pneg %p65
        %s292 = sand.u32 %s87, 1
        %s293 = scalar_lea.sflag [#allocation6], %s292
        %s294 = sand.u32 %s87, 1
        %s295 = smul.addr %s294, 8
        %s296 = scalar_lea.vmem [#allocation5], %s295
        %p297 = pneg %p100
        %p298 = pneg %p97
        %p299 = scmp.lt.s32.totalorder %s30, 0
        %s300 = scalar_select %p299, %s30, 0
        %s301 = smul.addr %s300, 8
        %s302 = scalar_lea.vmem %s2, %s301
        %p303 = pneg %p126
        %p304 = pneg %p123
        %p305 = scmp.lt.s32.totalorder %s30, 0
        %s306 = scalar_select %p305, %s30, 0
        %s307 = smul.addr %s306, 8
        %s308 = scalar_lea.vmem %s3, %s307
        %p309 = pneg %p152
        %p310 = pneg %p149
        %p311 = pneg %p182
        %p312 = pneg %p179
        %s313 = sand.u32 %s169, 1
        %s314 = scalar_lea.sflag [#allocation4], %s313
        %s315 = sand.u32 %s169, 1
        %s316 = smul.addr %s315, 8
        %s317 = scalar_lea.vmem [#allocation7], %s316
        %s318 = sadd.s32 %s31, 1
        %p319 = scmp.lt.s32.totalorder %s30, 0
        %s320 = scalar_select %p319, %s30, 0
        %s321 = smul.addr %s320, 8
        %s322 = scalar_lea.vmem %s2, %s321
        %p323 = scmp.lt.s32.totalorder %s30, 0
        %s324 = scalar_select %p323, %s30, 0
        %s325 = smul.addr %s324, 8
        %s326 = scalar_lea.vmem %s3, %s325
        %v327 = vld [vmem:[%s271] sm:$0xff]
        %v328 = vld [vmem:[%s280] sm:$0xff]
        %v329 = vld [vmem:[%s322] sm:$0xff]
        %v330 = vld [vmem:[%s326] sm:$0xff]
        %332 = vset.pattern.permute.xlu0 0
        %333 = vperm.xlu0 %332, %v330
        %v334 = vpop.permute.xlu0 %333
        %337 = vset.pattern.permute.xlu0 0
        %338 = vperm.xlu0 %337, %v329
        %v339 = vpop.permute.xlu0 %338
        %v341 = vmul.f32 %v339, %v327
        %v342 = vadd.f32 %v334, %v341
        %343 = vset.pattern.permute.xlu0 1
        %344 = vperm.xlu0 %343, %v329
        %v345 = vpop.permute.xlu0 %344
        %v347 = vmul.f32 %v345, %v327
        %v348 = vmul.f32 %v345, %v328
        %351 = vrot.lane.b32.xlu0 %v347, 127
        %v352 = vpop.permute.xlu0 %351
        %353 = vrot.lane.b32.xlu0 %v348, 127
        %v354 = vpop.permute.xlu0 %353
        %vm355 = vcmask 1039360
        %v356 = vsel %vm355, %v352, %v354
        %v358 = vadd.f32 %v342, %v356
        %359 = vset.pattern.permute.xlu0 2
        %360 = vperm.xlu0 %359, %v329
        %v361 = vpop.permute.xlu0 %360
        %v363 = vmul.f32 %v361, %v327
        %v364 = vmul.f32 %v361, %v328
        %367 = vrot.lane.b32.xlu0 %v363, 126
        %v368 = vpop.permute.xlu0 %367
        %369 = vrot.lane.b32.xlu0 %v364, 126
        %v370 = vpop.permute.xlu0 %369
        %vm371 = vcmask 1031168
        %v372 = vsel %vm371, %v368, %v370
        %v374 = vadd.f32 %v358, %v372
        %375 = vst [vmem:[%s317] sm:$0xff] %v374
        %s376 = sand.u32 %s169, 1
        %s377 = scalar_lea.sflag [#allocation4], %s376
        %s378 = sand.u32 %s169, 1
        %s379 = smul.addr %s378, 8
        %s380 = scalar_lea.vmem [#allocation7], %s379
        // Predicated region
        $region45: #{tpu_custom_call.1} parent=35 // pred_check
          %p381 = pneg %p179
        $region46: #{tpu_custom_call.1} parent=35 // pred_check_branch
          %383 = sbr.rel (%p381) target = $region48
        $region47: #{tpu_custom_call.1} parent=35 // pred_region
          %s385 = ssub.s32 128, 128
          %386 = vsyncadd %s377, %s385
          %s387 = sadd.s32 %s31, %s30
          %s388 = sadd.s32 %s387, %s29
          %s389 = smul.addr %s388, 128
          %s390 = scalar_lea.hbm %s4, %s389
          %s392 = sshll.u32 %s380, 4
          %s393 = int_to_ptr.vmem [resolvable:$true] %s392
          %395 = dma.vmem_to_hbm [thread:$0]  %s393, 128, %s390, %s377
        $region48: #{tpu_custom_call.1} parent=35 // pred_fallthru
          _
      $region36: #{tpu_custom_call.1} parent=5 // pred_fallthru
        _
      %p396 = scmp.le.s32.totalorder 2, %s19
      // Predicated region
      $region49: #{tpu_custom_call.1} parent=5 // pred_check
        %p397 = pneg %p396
      $region50: #{tpu_custom_call.1} parent=5 // pred_check_branch
        %399 = sbr.rel (%p397) target = $region52
      $region51: #{tpu_custom_call.1} parent=5 // pred_region
        %s400 = ssub.s32 %s19, 2
        // Predicated region
        $region53: #{tpu_custom_call.1} parent=51 // pred_check
          %p401 = pneg %p185
        $region54: #{tpu_custom_call.1} parent=51 // pred_check_branch
          %403 = sbr.rel (%p401) target = $region56
        $region55: #{tpu_custom_call.1} parent=51 // pred_region
          %s404 = sand.u32 %s170, 1
          %s405 = scalar_lea.sflag [#allocation4], %s404
          %s406 = sand.u32 %s170, 1
          %s407 = smul.addr %s406, 8
          %s408 = scalar_lea.vmem [#allocation7], %s407
          %409 = dma.done %s405, 128
        $region56: #{tpu_custom_call.1} parent=51 // pred_fallthru
          _
      $region52: #{tpu_custom_call.1} parent=5 // pred_fallthru
        _
    $region6: #{tpu_custom_call.1} parent=1 // loop_footer
      %s23 = sadd.s32 1, %s19
    $region7: #{tpu_custom_call.1} parent=1 // loop_footer_branch
      %18 = sbr.rel target = $region3
    $region8: #{tpu_custom_call.1} parent=1 // loop_exit
      _
    %410 = vsyncpa [#allocation3], 1
    %s411 = scalar_lea.sflag [#allocation3], 1
    %412 = vsyncpa %s411, 1
    %413 = vsyncpa [#allocation6], 1
    %s414 = scalar_lea.sflag [#allocation6], 1
    %415 = vsyncpa %s414, 1
    %416 = vsyncpa [#allocation4], 1
    %s417 = scalar_lea.sflag [#allocation4], 1
    %418 = vsyncpa %s417, 1

</llo_original>
